<compile_context>
chip_gen: v5e
topology: v5e:2x2
jax: 0.10.0
libtpu: 0.0.40
codegen_flags: <defaults>
</compile_context>

<pallas_src>
import jax
import jax.numpy as jnp
from jax.experimental import pallas as pl
from jax.experimental.pallas import tpu as pltpu

# ---------------- config (small, consistent with the module) ----------------
B, S, H = 2, 8, 32            # batch, seq_len, hidden_size
N_HEADS = 4                   # num_attention_heads
N_KV_HEADS = 2                # num_key_value_heads
HEAD_DIM = H // N_HEADS       # 8
N_KV_GROUPS = N_HEADS // N_KV_HEADS
KV_DIM = N_KV_HEADS * HEAD_DIM          # 16
QKV_DIM = H + 2 * KV_DIM                # 64   (q | k | v lanes of the fused projection)
INTER = 64                    # intermediate_size
EPS = 1e-8                    # RMSNorm eps of GPTBlock's norm1/norm2
ROPE_THETA = 10000.0
SCALE = HEAD_DIM ** -0.5

# packed-parameter buffer: one parameter per sublane row of an (8, 128) f32 slab
ROW_N1, ROW_BQKVR, ROW_BO, ROW_N2, ROW_BGU, ROW_BD = 0, 1, 2, 3, 4, 5
P_ROWS, P_LANES = 8, 128


def gpt_block_kernel(x_ref, mask_ref, trig_ref, wqkvr_ref, wo_ref, wgu_ref,
                     wd_ref, p_ref, out_ref):
    # One batch per grid step.
    x = x_ref[0].astype(jnp.float32)            # (S, H)
    mask = mask_ref[0].astype(jnp.float32)      # (S, S) additive mask for this batch

    # packed small params: one per sublane row, every slice starts at lane 0 (aligned)
    n1 = p_ref[ROW_N1:ROW_N1 + 1, :H]                    # (1, H)
    bqkvr = p_ref[ROW_BQKVR:ROW_BQKVR + 1, :]            # (1, 128)  [bqkv | bqkv@rot]
    bo = p_ref[ROW_BO:ROW_BO + 1, :H]                    # (1, H)
    n2 = p_ref[ROW_N2:ROW_N2 + 1, :H]                    # (1, H)
    bgu = p_ref[ROW_BGU:ROW_BGU + 1, :]                  # (1, 128)  [bg | bu]
    bd = p_ref[ROW_BD:ROW_BD + 1, :H]                    # (1, H)

    # ---------------- RMSNorm 1 ----------------
    var = jnp.mean(x * x, axis=-1, keepdims=True)
    xn = (x * jax.lax.rsqrt(var + EPS) * n1).astype(jnp.bfloat16)            # (S, H)

    # ---------------- fused q|k|v projection with RoPE rotation folded in ----------------
    # y[:, :64] = qkv   (scale already folded into q columns)
    # y[:, 64:] = qkv @ rot   (per-head rotate_half; v block passes through via cos=1/sin=0)
    y = jnp.dot(xn, wqkvr_ref[...], preferred_element_type=jnp.float32) + bqkvr  # (S, 128)
    cos = trig_ref[:, :QKV_DIM]                          # (S, 64)
    sin = trig_ref[:, QKV_DIM:]                          # (S, 64)
    qkv_e = y[:, :QKV_DIM] * cos + y[:, QKV_DIM:] * sin  # (S, 64)

    # ---------------- GQA attention, all heads batched ----------------
    hd = HEAD_DIM
    q_heads = jnp.stack(
        [qkv_e[:, h * hd:(h + 1) * hd] for h in range(N_HEADS)],
        axis=0).astype(jnp.bfloat16)                      # (N_HEADS, S, hd)
    k_heads = jnp.stack(                                  # repeat_kv via shared lane slices
        [qkv_e[:, H + (h // N_KV_GROUPS) * hd:H + (h // N_KV_GROUPS + 1) * hd]
         for h in range(N_HEADS)], axis=0).astype(jnp.bfloat16)
    v_heads = jnp.stack(
        [qkv_e[:, H + KV_DIM + (h // N_KV_GROUPS) * hd:
               H + KV_DIM + (h // N_KV_GROUPS + 1) * hd]
         for h in range(N_HEADS)], axis=0).astype(jnp.bfloat16)

    scores = jnp.einsum('hqd,hkd->hqk', q_heads, k_heads,
                        preferred_element_type=jnp.float32) + mask[None]      # (N_HEADS, S, S)
    scores = scores - jnp.max(scores, axis=-1, keepdims=True)
    p = jnp.exp(scores)
    p = p * pl.reciprocal(jnp.sum(p, axis=-1, keepdims=True), approx=True)
    # TODO(synk): attention dropout is identity in eval mode; not implemented.
    ctx = jnp.einsum('hqk,hkd->hqd', p.astype(jnp.bfloat16), v_heads,
                     preferred_element_type=jnp.float32)                      # (N_HEADS, S, hd)
    ctx2d = jnp.concatenate([ctx[h] for h in range(N_HEADS)], axis=-1)        # (S, H)

    attn_out = jnp.dot(ctx2d.astype(jnp.bfloat16), wo_ref[...],
                       preferred_element_type=jnp.float32) + bo
    residual = x + attn_out

    # ---------------- RMSNorm 2 + SwiGLU MLP (gate|up fused, 128 output lanes) ----------------
    var2 = jnp.mean(residual * residual, axis=-1, keepdims=True)
    rn = (residual * jax.lax.rsqrt(var2 + EPS) * n2).astype(jnp.bfloat16)
    gu = jnp.dot(rn, wgu_ref[...], preferred_element_type=jnp.float32) + bgu  # (S, 128)
    gate = gu[:, :INTER]
    up = gu[:, INTER:]
    act = (gate * jax.nn.sigmoid(gate) * up).astype(jnp.bfloat16)             # SiLU(gate)*up
    mlp = jnp.dot(act, wd_ref[...], preferred_element_type=jnp.float32) + bd

    out_ref[0] = (residual + mlp).astype(out_ref.dtype)


def make_rotary_tables(seq_len, head_dim, base):
    # Matches RotaryEmbedding.forward with position_ids = arange(seq_len)
    inv_freq = 1.0 / (base ** (jnp.arange(0, head_dim, 2, dtype=jnp.float32) / head_dim))
    pos = jnp.arange(seq_len, dtype=jnp.float32)
    freqs = pos[:, None] * inv_freq[None, :]                     # (S, hd/2)
    emb = jnp.concatenate([freqs, freqs], axis=-1)               # (S, hd)
    return jnp.cos(emb), jnp.sin(emb)


def make_qkv_rot_matrix():
    # per-head rotate_half as a matrix acting on the right: x @ r == cat(-x2, x1)
    hd2 = HEAD_DIM // 2
    r = jnp.zeros((HEAD_DIM, HEAD_DIM), jnp.float32)
    r = r.at[jnp.arange(hd2) + hd2, jnp.arange(hd2)].set(-1.0)
    r = r.at[jnp.arange(hd2), jnp.arange(hd2) + hd2].set(1.0)
    # block-diagonal over the fused q|k|v layout: q heads + k heads rotated, v blocks zero
    n_blocks = N_HEADS + 2 * N_KV_HEADS
    n_rot = N_HEADS + N_KV_HEADS
    sel = jnp.zeros((n_blocks, n_blocks), jnp.float32)
    sel = sel.at[jnp.arange(n_rot), jnp.arange(n_rot)].set(1.0)
    return jnp.kron(sel, r)                                      # (QKV_DIM, QKV_DIM)


@jax.jit
def gpt_block(x, attention_mask, cos, sin, params):
    (n1, wq, bq, wk, bk, wv, bv, wo, bo, n2, wg, bg, wu, bu, wd, bd) = params

    # ---- fuse q|k|v, fold the attention scale into q, and fold RoPE rotation in ----
    wqkv = jnp.concatenate([wq * SCALE, wk, wv], axis=1)         # (H, 64)
    bqkv = jnp.concatenate([bq * SCALE, bk, bv], axis=1)         # (1, 64)
    rot = make_qkv_rot_matrix()                                  # (64, 64) constant
    wqkvr = jnp.concatenate([wqkv, wqkv @ rot], axis=1).astype(jnp.bfloat16)  # (H, 128)
    bqkvr = jnp.concatenate([bqkv, bqkv @ rot], axis=1)          # (1, 128) f32

    wgu = jnp.concatenate([wg, wu], axis=1).astype(jnp.bfloat16)  # (H, 128)
    bgu = jnp.concatenate([bg, bu], axis=1)                       # (1, 128) f32

    # ---- packed small params: one per sublane row of an (8, 128) buffer (lane-aligned) ----
    def row(v):
        return jnp.pad(v.astype(jnp.float32), ((0, 0), (0, P_LANES - v.shape[1])))
    packed = jnp.concatenate(
        [row(n1), row(bqkvr), row(bo), row(n2), row(bgu), row(bd),
         jnp.zeros((P_ROWS - 6, P_LANES), jnp.float32)], axis=0)  # (8, 128)

    # ---- cos/sin tiled per head block of the fused q|k|v layout, one (S, 128) table ----
    cos_all = jnp.concatenate(
        [jnp.tile(cos, (1, N_HEADS)), jnp.tile(cos, (1, N_KV_HEADS)),
         jnp.ones((S, KV_DIM), jnp.float32)], axis=-1)            # (S, 64)
    sin_all = jnp.concatenate(
        [jnp.tile(sin, (1, N_HEADS)), jnp.tile(sin, (1, N_KV_HEADS)),
         jnp.zeros((S, KV_DIM), jnp.float32)], axis=-1)           # (S, 64)
    trig = jnp.concatenate([cos_all, sin_all], axis=-1)           # (S, 128)

    mask = attention_mask.reshape(B, S, S).astype(jnp.float32)    # module's additive mask

    out = pl.pallas_call(
        gpt_block_kernel,
        out_shape=jax.ShapeDtypeStruct((B, S, H), jnp.float32),
        grid=(B,),
        in_specs=[
            pl.BlockSpec((1, S, H), lambda b: (b, 0, 0)),          # x (per batch)
            pl.BlockSpec((1, S, S), lambda b: (b, 0, 0)),          # additive mask (per batch)
            pl.BlockSpec((S, 2 * QKV_DIM), lambda b: (0, 0)),      # cos|sin table (resident)
            pl.BlockSpec((H, 2 * QKV_DIM), lambda b: (0, 0)),      # [wqkv | wqkv@rot] bf16
            pl.BlockSpec((H, H), lambda b: (0, 0)),                # wo bf16
            pl.BlockSpec((H, 2 * INTER), lambda b: (0, 0)),        # [wg | wu] bf16
            pl.BlockSpec((INTER, H), lambda b: (0, 0)),            # wd bf16
            pl.BlockSpec((P_ROWS, P_LANES), lambda b: (0, 0)),     # packed params
        ],
        out_specs=pl.BlockSpec((1, S, H), lambda b: (b, 0, 0)),
        compiler_params=pltpu.CompilerParams(
            dimension_semantics=("parallel",)),                    # 2nd TC on v7x takes batch 1
    )(x.astype(jnp.float32), mask, trig, wqkvr,
      wo.astype(jnp.bfloat16), wgu, wd.astype(jnp.bfloat16), packed)

    return out


def init_params(key):
    def dense(k, fan_in, fan_out):
        kw, kb = jax.random.split(k)
        w = jax.random.normal(kw, (fan_in, fan_out), jnp.float32) * 0.02
        b = jax.random.normal(kb, (1, fan_out), jnp.float32) * 0.02
        return w, b

    ks = jax.random.split(key, 8)
    wq, bq = dense(ks[0], H, H)
    wk, bk = dense(ks[1], H, KV_DIM)
    wv, bv = dense(ks[2], H, KV_DIM)
    wo, bo = dense(ks[3], H, H)
    wg, bg = dense(ks[4], H, INTER)
    wu, bu = dense(ks[5], H, INTER)
    wd, bd = dense(ks[6], INTER, H)
    n1 = jnp.ones((1, H), jnp.float32)
    n2 = jnp.ones((1, H), jnp.float32)
    return (n1, wq, bq, wk, bk, wv, bv, wo, bo, n2, wg, bg, wu, bu, wd, bd)


if __name__ == "__main__":
    key = jax.random.PRNGKey(0)
    k_x, k_p = jax.random.split(key)

    x = jax.random.normal(k_x, (B, S, H), jnp.float32)

    # additive causal mask, (B, 1, S, S), as the module expects
    row_i = jnp.arange(S)[:, None]
    col_j = jnp.arange(S)[None, :]
    causal = jnp.where(col_j <= row_i, 0.0, -1e9).astype(jnp.float32)
    attention_mask = jnp.broadcast_to(causal, (B, 1, S, S))

    cos, sin = make_rotary_tables(S, HEAD_DIM, ROPE_THETA)
    params = init_params(k_p)

    out = gpt_block(x, attention_mask, cos, sin, params)
    jax.block_until_ready(out)
    print("KERNEL_OK")
</pallas_src>

<mosaic_0001>
module attributes {stable_mosaic.version = 11 : i64} {
  func.func @gpt_block_kernel(%arg0: i32, %arg1: memref<1x8x32xf32, #tpu.memory_space<vmem>>, %arg2: memref<1x8x8xf32, #tpu.memory_space<vmem>>, %arg3: memref<8x128xf32, #tpu.memory_space<vmem>>, %arg4: memref<32x128xbf16, #tpu.memory_space<vmem>>, %arg5: memref<32x32xbf16, #tpu.memory_space<vmem>>, %arg6: memref<32x128xbf16, #tpu.memory_space<vmem>>, %arg7: memref<64x32xbf16, #tpu.memory_space<vmem>>, %arg8: memref<8x128xf32, #tpu.memory_space<vmem>>, %arg9: memref<1x8x32xf32, #tpu.memory_space<vmem>>) attributes {dimension_semantics = [#tpu.dimension_semantics<parallel>], iteration_bounds = array<i64: 2>, scalar_prefetch = 0 : i64, scratch_operands = 0 : i64, tpu.core_type = #tpu.core_type<tc>, window_params = [{transform_indices = @transform_0, window_bounds = array<i64: 1, 8, 32>}, {transform_indices = @transform_1, window_bounds = array<i64: 1, 8, 8>}, {pipeline_mode = #tpu.pipeline_mode<synchronous>, transform_indices = @transform_2, window_bounds = array<i64: 8, 128>}, {pipeline_mode = #tpu.pipeline_mode<synchronous>, transform_indices = @transform_3, window_bounds = array<i64: 32, 128>}, {pipeline_mode = #tpu.pipeline_mode<synchronous>, transform_indices = @transform_4, window_bounds = array<i64: 32, 32>}, {pipeline_mode = #tpu.pipeline_mode<synchronous>, transform_indices = @transform_5, window_bounds = array<i64: 32, 128>}, {pipeline_mode = #tpu.pipeline_mode<synchronous>, transform_indices = @transform_6, window_bounds = array<i64: 64, 32>}, {pipeline_mode = #tpu.pipeline_mode<synchronous>, transform_indices = @transform_7, window_bounds = array<i64: 8, 128>}, {transform_indices = @transform_8, window_bounds = array<i64: 1, 8, 32>}]} {
    %c0 = arith.constant 0 : index
    %c0_0 = arith.constant 0 : index
    %c0_1 = arith.constant 0 : index
    %0 = vector.load %arg1[%c0, %c0_0, %c0_1] : memref<1x8x32xf32, #tpu.memory_space<vmem>>, vector<1x8x32xf32>
    %1 = vector.shape_cast %0 : vector<1x8x32xf32> to vector<8x32xf32>
    %c0_2 = arith.constant 0 : index
    %c0_3 = arith.constant 0 : index
    %c0_4 = arith.constant 0 : index
    %2 = vector.load %arg2[%c0_2, %c0_3, %c0_4] : memref<1x8x8xf32, #tpu.memory_space<vmem>>, vector<1x8x8xf32>
    %3 = vector.shape_cast %2 : vector<1x8x8xf32> to vector<8x8xf32>
    %c0_5 = arith.constant 0 : index
    %c0_6 = arith.constant 0 : index
    %4 = vector.load %arg8[%c0_5, %c0_6] : memref<8x128xf32, #tpu.memory_space<vmem>>, vector<1x32xf32>
    %c1 = arith.constant 1 : index
    %c0_7 = arith.constant 0 : index
    %5 = vector.load %arg8[%c1, %c0_7] : memref<8x128xf32, #tpu.memory_space<vmem>>, vector<1x128xf32>
    %c2 = arith.constant 2 : index
    %c0_8 = arith.constant 0 : index
    %6 = vector.load %arg8[%c2, %c0_8] : memref<8x128xf32, #tpu.memory_space<vmem>>, vector<1x32xf32>
    %c3 = arith.constant 3 : index
    %c0_9 = arith.constant 0 : index
    %7 = vector.load %arg8[%c3, %c0_9] : memref<8x128xf32, #tpu.memory_space<vmem>>, vector<1x32xf32>
    %c4 = arith.constant 4 : index
    %c0_10 = arith.constant 0 : index
    %8 = vector.load %arg8[%c4, %c0_10] : memref<8x128xf32, #tpu.memory_space<vmem>>, vector<1x128xf32>
    %c5 = arith.constant 5 : index
    %c0_11 = arith.constant 0 : index
    %9 = vector.load %arg8[%c5, %c0_11] : memref<8x128xf32, #tpu.memory_space<vmem>>, vector<1x32xf32>
    %10 = arith.mulf %1, %1 : vector<8x32xf32>
    %cst = arith.constant dense<0.000000e+00> : vector<8xf32>
    %11 = vector.multi_reduction <add>, %10, %cst [1] : vector<8x32xf32> to vector<8xf32>
    %12 = vector.shape_cast %11 : vector<8xf32> to vector<8x1xf32>
    %cst_12 = arith.constant 3.200000e+01 : f32
    %13 = vector.broadcast %cst_12 : f32 to vector<8x1xf32>
    %14 = arith.divf %12, %13 : vector<8x1xf32>
    %cst_13 = arith.constant 9.99999993E-9 : f32
    %15 = vector.broadcast %cst_13 : f32 to vector<8x1xf32>
    %16 = arith.addf %14, %15 : vector<8x1xf32>
    %17 = math.rsqrt %16 : vector<8x1xf32>
    %18 = vector.broadcast %17 : vector<8x1xf32> to vector<8x32xf32>
    %19 = arith.mulf %1, %18 : vector<8x32xf32>
    %20 = vector.broadcast %4 : vector<1x32xf32> to vector<8x32xf32>
    %21 = arith.mulf %19, %20 : vector<8x32xf32>
    %22 = arith.truncf %21 : vector<8x32xf32> to vector<8x32xbf16>
    %c0_14 = arith.constant 0 : index
    %c0_15 = arith.constant 0 : index
    %23 = vector.load %arg4[%c0_14, %c0_15] : memref<32x128xbf16, #tpu.memory_space<vmem>>, vector<32x128xbf16>
    %cst_16 = arith.constant dense<0.000000e+00> : vector<8x128xf32>
    %24 = tpu.matmul %22, %23, %cst_16 {dimension_numbers = #tpu.dot_dimension_numbers<[1], [0], [0], [1], [0, 0, 1, 1], [], []>} : vector<8x32xbf16>, vector<32x128xbf16>, vector<8x128xf32> -> vector<8x128xf32>
    %25 = vector.broadcast %5 : vector<1x128xf32> to vector<8x128xf32>
    %26 = arith.addf %24, %25 : vector<8x128xf32>
    %c0_17 = arith.constant 0 : index
    %c0_18 = arith.constant 0 : index
    %27 = vector.load %arg3[%c0_17, %c0_18] : memref<8x128xf32, #tpu.memory_space<vmem>>, vector<8x64xf32>
    %c0_19 = arith.constant 0 : index
    %c64 = arith.constant 64 : index
    %28 = vector.load %arg3[%c0_19, %c64] : memref<8x128xf32, #tpu.memory_space<vmem>>, vector<8x64xf32>
    %29 = vector.extract_strided_slice %26 {offsets = [0, 0], sizes = [8, 64], strides = [1, 1]} : vector<8x128xf32> to vector<8x64xf32>
    %30 = arith.mulf %29, %27 : vector<8x64xf32>
    %31 = vector.extract_strided_slice %26 {offsets = [0, 64], sizes = [8, 64], strides = [1, 1]} : vector<8x128xf32> to vector<8x64xf32>
    %32 = arith.mulf %31, %28 : vector<8x64xf32>
    %33 = arith.addf %30, %32 : vector<8x64xf32>
    %34 = vector.extract_strided_slice %33 {offsets = [0, 0], sizes = [8, 8], strides = [1, 1]} : vector<8x64xf32> to vector<8x8xf32>
    %35 = vector.extract_strided_slice %33 {offsets = [0, 8], sizes = [8, 8], strides = [1, 1]} : vector<8x64xf32> to vector<8x8xf32>
    %36 = vector.extract_strided_slice %33 {offsets = [0, 16], sizes = [8, 8], strides = [1, 1]} : vector<8x64xf32> to vector<8x8xf32>
    %37 = vector.extract_strided_slice %33 {offsets = [0, 24], sizes = [8, 8], strides = [1, 1]} : vector<8x64xf32> to vector<8x8xf32>
    %38 = vector.shape_cast %34 : vector<8x8xf32> to vector<1x8x8xf32>
    %39 = vector.shape_cast %35 : vector<8x8xf32> to vector<1x8x8xf32>
    %40 = vector.shape_cast %36 : vector<8x8xf32> to vector<1x8x8xf32>
    %41 = vector.shape_cast %37 : vector<8x8xf32> to vector<1x8x8xf32>
    %42 = tpu.concatenate %38, %39, %40, %41 in 0 : vector<1x8x8xf32>, vector<1x8x8xf32>, vector<1x8x8xf32>, vector<1x8x8xf32> -> vector<4x8x8xf32>
    %43 = arith.truncf %42 : vector<4x8x8xf32> to vector<4x8x8xbf16>
    %44 = vector.extract_strided_slice %33 {offsets = [0, 32], sizes = [8, 8], strides = [1, 1]} : vector<8x64xf32> to vector<8x8xf32>
    %45 = vector.extract_strided_slice %33 {offsets = [0, 32], sizes = [8, 8], strides = [1, 1]} : vector<8x64xf32> to vector<8x8xf32>
    %46 = vector.extract_strided_slice %33 {offsets = [0, 40], sizes = [8, 8], strides = [1, 1]} : vector<8x64xf32> to vector<8x8xf32>
    %47 = vector.extract_strided_slice %33 {offsets = [0, 40], sizes = [8, 8], strides = [1, 1]} : vector<8x64xf32> to vector<8x8xf32>
    %48 = vector.shape_cast %44 : vector<8x8xf32> to vector<1x8x8xf32>
    %49 = vector.shape_cast %45 : vector<8x8xf32> to vector<1x8x8xf32>
    %50 = vector.shape_cast %46 : vector<8x8xf32> to vector<1x8x8xf32>
    %51 = vector.shape_cast %47 : vector<8x8xf32> to vector<1x8x8xf32>
    %52 = tpu.concatenate %48, %49, %50, %51 in 0 : vector<1x8x8xf32>, vector<1x8x8xf32>, vector<1x8x8xf32>, vector<1x8x8xf32> -> vector<4x8x8xf32>
    %53 = arith.truncf %52 : vector<4x8x8xf32> to vector<4x8x8xbf16>
    %54 = vector.extract_strided_slice %33 {offsets = [0, 48], sizes = [8, 8], strides = [1, 1]} : vector<8x64xf32> to vector<8x8xf32>
    %55 = vector.extract_strided_slice %33 {offsets = [0, 48], sizes = [8, 8], strides = [1, 1]} : vector<8x64xf32> to vector<8x8xf32>
    %56 = vector.extract_strided_slice %33 {offsets = [0, 56], sizes = [8, 8], strides = [1, 1]} : vector<8x64xf32> to vector<8x8xf32>
    %57 = vector.extract_strided_slice %33 {offsets = [0, 56], sizes = [8, 8], strides = [1, 1]} : vector<8x64xf32> to vector<8x8xf32>
    %58 = vector.shape_cast %54 : vector<8x8xf32> to vector<1x8x8xf32>
    %59 = vector.shape_cast %55 : vector<8x8xf32> to vector<1x8x8xf32>
    %60 = vector.shape_cast %56 : vector<8x8xf32> to vector<1x8x8xf32>
    %61 = vector.shape_cast %57 : vector<8x8xf32> to vector<1x8x8xf32>
    %62 = tpu.concatenate %58, %59, %60, %61 in 0 : vector<1x8x8xf32>, vector<1x8x8xf32>, vector<1x8x8xf32>, vector<1x8x8xf32> -> vector<4x8x8xf32>
    %63 = arith.truncf %62 : vector<4x8x8xf32> to vector<4x8x8xbf16>
    "tpu.trace_start"() <{level = 10 : i32, message = "hqd,hkd->hqk"}> : () -> ()
    %cst_20 = arith.constant dense<0.000000e+00> : vector<4x8x8xf32>
    %64 = tpu.matmul %43, %53, %cst_20 {dimension_numbers = #tpu.dot_dimension_numbers<[2], [2], [1], [1], [0, 0, 0, 1, 1, 1], [0], [0]>} : vector<4x8x8xbf16>, vector<4x8x8xbf16>, vector<4x8x8xf32> -> vector<4x8x8xf32>
    "tpu.trace_stop"() : () -> ()
    %65 = vector.shape_cast %3 : vector<8x8xf32> to vector<1x8x8xf32>
    %66 = vector.broadcast %65 : vector<1x8x8xf32> to vector<4x8x8xf32>
    %67 = arith.addf %64, %66 : vector<4x8x8xf32>
    %cst_21 = arith.constant dense<0xFF800000> : vector<4x8xf32>
    %68 = vector.multi_reduction <maximumf>, %67, %cst_21 [2] : vector<4x8x8xf32> to vector<4x8xf32>
    %69 = vector.shape_cast %68 : vector<4x8xf32> to vector<4x8x1xf32>
    %70 = vector.broadcast %69 : vector<4x8x1xf32> to vector<4x8x8xf32>
    %71 = arith.subf %67, %70 : vector<4x8x8xf32>
    %72 = math.exp %71 : vector<4x8x8xf32>
    %cst_22 = arith.constant dense<0.000000e+00> : vector<4x8xf32>
    %73 = vector.multi_reduction <add>, %72, %cst_22 [2] : vector<4x8x8xf32> to vector<4x8xf32>
    %74 = vector.shape_cast %73 : vector<4x8xf32> to vector<4x8x1xf32>
    %75 = tpu.reciprocal %74 {approx = true} : vector<4x8x1xf32> -> vector<4x8x1xf32>
    %76 = vector.broadcast %75 : vector<4x8x1xf32> to vector<4x8x8xf32>
    %77 = arith.mulf %72, %76 : vector<4x8x8xf32>
    %78 = arith.truncf %77 : vector<4x8x8xf32> to vector<4x8x8xbf16>
    "tpu.trace_start"() <{level = 10 : i32, message = "hqk,hkd->hqd"}> : () -> ()
    %cst_23 = arith.constant dense<0.000000e+00> : vector<4x8x8xf32>
    %79 = tpu.matmul %78, %63, %cst_23 {dimension_numbers = #tpu.dot_dimension_numbers<[2], [1], [1], [2], [0, 0, 0, 1, 1, 2], [0], [0]>} : vector<4x8x8xbf16>, vector<4x8x8xbf16>, vector<4x8x8xf32> -> vector<4x8x8xf32>
    "tpu.trace_stop"() : () -> ()
    %80 = vector.extract_strided_slice %79 {offsets = [0, 0, 0], sizes = [1, 8, 8], strides = [1, 1, 1]} : vector<4x8x8xf32> to vector<1x8x8xf32>
    %81 = vector.shape_cast %80 : vector<1x8x8xf32> to vector<8x8xf32>
    %82 = vector.extract_strided_slice %79 {offsets = [1, 0, 0], sizes = [1, 8, 8], strides = [1, 1, 1]} : vector<4x8x8xf32> to vector<1x8x8xf32>
    %83 = vector.shape_cast %82 : vector<1x8x8xf32> to vector<8x8xf32>
    %84 = vector.extract_strided_slice %79 {offsets = [2, 0, 0], sizes = [1, 8, 8], strides = [1, 1, 1]} : vector<4x8x8xf32> to vector<1x8x8xf32>
    %85 = vector.shape_cast %84 : vector<1x8x8xf32> to vector<8x8xf32>
    %86 = vector.extract_strided_slice %79 {offsets = [3, 0, 0], sizes = [1, 8, 8], strides = [1, 1, 1]} : vector<4x8x8xf32> to vector<1x8x8xf32>
    %87 = vector.shape_cast %86 : vector<1x8x8xf32> to vector<8x8xf32>
    %88 = tpu.concatenate %81, %83, %85, %87 in 1 : vector<8x8xf32>, vector<8x8xf32>, vector<8x8xf32>, vector<8x8xf32> -> vector<8x32xf32>
    %89 = arith.truncf %88 : vector<8x32xf32> to vector<8x32xbf16>
    %c0_24 = arith.constant 0 : index
    %c0_25 = arith.constant 0 : index
    %90 = vector.load %arg5[%c0_24, %c0_25] : memref<32x32xbf16, #tpu.memory_space<vmem>>, vector<32x32xbf16>
    %cst_26 = arith.constant dense<0.000000e+00> : vector<8x32xf32>
    %91 = tpu.matmul %89, %90, %cst_26 {dimension_numbers = #tpu.dot_dimension_numbers<[1], [0], [0], [1], [0, 0, 1, 1], [], []>} : vector<8x32xbf16>, vector<32x32xbf16>, vector<8x32xf32> -> vector<8x32xf32>
    %92 = vector.broadcast %6 : vector<1x32xf32> to vector<8x32xf32>
    %93 = arith.addf %91, %92 : vector<8x32xf32>
    %94 = arith.addf %1, %93 : vector<8x32xf32>
    %95 = arith.mulf %94, %94 : vector<8x32xf32>
    %cst_27 = arith.constant dense<0.000000e+00> : vector<8xf32>
    %96 = vector.multi_reduction <add>, %95, %cst_27 [1] : vector<8x32xf32> to vector<8xf32>
    %97 = vector.shape_cast %96 : vector<8xf32> to vector<8x1xf32>
    %cst_28 = arith.constant 3.200000e+01 : f32
    %98 = vector.broadcast %cst_28 : f32 to vector<8x1xf32>
    %99 = arith.divf %97, %98 : vector<8x1xf32>
    %cst_29 = arith.constant 9.99999993E-9 : f32
    %100 = vector.broadcast %cst_29 : f32 to vector<8x1xf32>
    %101 = arith.addf %99, %100 : vector<8x1xf32>
    %102 = math.rsqrt %101 : vector<8x1xf32>
    %103 = vector.broadcast %102 : vector<8x1xf32> to vector<8x32xf32>
    %104 = arith.mulf %94, %103 : vector<8x32xf32>
    %105 = vector.broadcast %7 : vector<1x32xf32> to vector<8x32xf32>
    %106 = arith.mulf %104, %105 : vector<8x32xf32>
    %107 = arith.truncf %106 : vector<8x32xf32> to vector<8x32xbf16>
    %c0_30 = arith.constant 0 : index
    %c0_31 = arith.constant 0 : index
    %108 = vector.load %arg6[%c0_30, %c0_31] : memref<32x128xbf16, #tpu.memory_space<vmem>>, vector<32x128xbf16>
    %cst_32 = arith.constant dense<0.000000e+00> : vector<8x128xf32>
    %109 = tpu.matmul %107, %108, %cst_32 {dimension_numbers = #tpu.dot_dimension_numbers<[1], [0], [0], [1], [0, 0, 1, 1], [], []>} : vector<8x32xbf16>, vector<32x128xbf16>, vector<8x128xf32> -> vector<8x128xf32>
    %110 = vector.broadcast %8 : vector<1x128xf32> to vector<8x128xf32>
    %111 = arith.addf %109, %110 : vector<8x128xf32>
    %112 = vector.extract_strided_slice %111 {offsets = [0, 0], sizes = [8, 64], strides = [1, 1]} : vector<8x128xf32> to vector<8x64xf32>
    %113 = vector.extract_strided_slice %111 {offsets = [0, 64], sizes = [8, 64], strides = [1, 1]} : vector<8x128xf32> to vector<8x64xf32>
    %114 = arith.negf %112 : vector<8x64xf32>
    %115 = math.exp %114 : vector<8x64xf32>
    %cst_33 = arith.constant 1.000000e+00 : f32
    %116 = vector.broadcast %cst_33 : f32 to vector<8x64xf32>
    %117 = arith.addf %116, %115 : vector<8x64xf32>
    %118 = arith.divf %116, %117 : vector<8x64xf32>
    %119 = arith.mulf %112, %118 : vector<8x64xf32>
    %120 = arith.mulf %119, %113 : vector<8x64xf32>
    %121 = arith.truncf %120 : vector<8x64xf32> to vector<8x64xbf16>
    %c0_34 = arith.constant 0 : index
    %c0_35 = arith.constant 0 : index
    %122 = vector.load %arg7[%c0_34, %c0_35] : memref<64x32xbf16, #tpu.memory_space<vmem>>, vector<64x32xbf16>
    %cst_36 = arith.constant dense<0.000000e+00> : vector<8x32xf32>
    %123 = tpu.matmul %121, %122, %cst_36 {dimension_numbers = #tpu.dot_dimension_numbers<[1], [0], [0], [1], [0, 0, 1, 1], [], []>} : vector<8x64xbf16>, vector<64x32xbf16>, vector<8x32xf32> -> vector<8x32xf32>
    %124 = vector.broadcast %9 : vector<1x32xf32> to vector<8x32xf32>
    %125 = arith.addf %123, %124 : vector<8x32xf32>
    %126 = arith.addf %94, %125 : vector<8x32xf32>
    %c0_37 = arith.constant 0 : index
    %c0_38 = arith.constant 0 : index
    %c0_39 = arith.constant 0 : index
    %127 = vector.load %arg9[%c0_37, %c0_38, %c0_39] : memref<1x8x32xf32, #tpu.memory_space<vmem>>, vector<1x8x32xf32>
    %128 = vector.shape_cast %127 : vector<1x8x32xf32> to vector<8x32xf32>
    %129 = vector.shape_cast %126 : vector<8x32xf32> to vector<1x8x32xf32>
    tpu.vector_store %arg9[%c0_37, %c0_38, %c0_39], %129 {strides = array<i32>} : memref<1x8x32xf32, #tpu.memory_space<vmem>>, vector<1x8x32xf32>,
    return
  }
  func.func @transform_0(%arg0: i32) -> (i32, i32, i32) {
    %c0_i32 = arith.constant 0 : i32
    %c0_i32_0 = arith.constant 0 : i32
    %c0_i32_1 = arith.constant 0 : i32
    return %arg0, %c0_i32, %c0_i32_0 : i32, i32, i32
  }
  func.func @transform_1(%arg0: i32) -> (i32, i32, i32) {
    %c0_i32 = arith.constant 0 : i32
    %c0_i32_0 = arith.constant 0 : i32
    %c0_i32_1 = arith.constant 0 : i32
    return %arg0, %c0_i32, %c0_i32_0 : i32, i32, i32
  }
  func.func @transform_2(%arg0: i32) -> (i32, i32) {
    %c0_i32 = arith.constant 0 : i32
    %c0_i32_0 = arith.constant 0 : i32
    %c0_i32_1 = arith.constant 0 : i32
    return %c0_i32, %c0_i32_0 : i32, i32
  }
  func.func @transform_3(%arg0: i32) -> (i32, i32) {
    %c0_i32 = arith.constant 0 : i32
    %c0_i32_0 = arith.constant 0 : i32
    %c0_i32_1 = arith.constant 0 : i32
    return %c0_i32, %c0_i32_0 : i32, i32
  }
  func.func @transform_4(%arg0: i32) -> (i32, i32) {
    %c0_i32 = arith.constant 0 : i32
    %c0_i32_0 = arith.constant 0 : i32
    %c0_i32_1 = arith.constant 0 : i32
    return %c0_i32, %c0_i32_0 : i32, i32
  }
  func.func @transform_5(%arg0: i32) -> (i32, i32) {
    %c0_i32 = arith.constant 0 : i32
    %c0_i32_0 = arith.constant 0 : i32
    %c0_i32_1 = arith.constant 0 : i32
    return %c0_i32, %c0_i32_0 : i32, i32
  }
  func.func @transform_6(%arg0: i32) -> (i32, i32) {
    %c0_i32 = arith.constant 0 : i32
    %c0_i32_0 = arith.constant 0 : i32
    %c0_i32_1 = arith.constant 0 : i32
    return %c0_i32, %c0_i32_0 : i32, i32
  }
  func.func @transform_7(%arg0: i32) -> (i32, i32) {
    %c0_i32 = arith.constant 0 : i32
    %c0_i32_0 = arith.constant 0 : i32
    %c0_i32_1 = arith.constant 0 : i32
    return %c0_i32, %c0_i32_0 : i32, i32
  }
  func.func @transform_8(%arg0: i32) -> (i32, i32, i32) {
    %c0_i32 = arith.constant 0 : i32
    %c0_i32_0 = arith.constant 0 : i32
    %c0_i32_1 = arith.constant 0 : i32
    return %arg0, %c0_i32, %c0_i32_0 : i32, i32, i32
  }
}

</mosaic_0001>

<llo_original>
// kernel: tile.24
$region0: #{tile.24}
  %s0 = inlined_call_operand.vmem [shape: f32[8,4,8], index: 0, kind: input, shape index: {}]
  %s1 = inlined_call_operand.vmem [shape: f32[8,32], index: 1, kind: output, shape index: {}]
  $region1: #{tile.24} parent=0
    #allocation0 [shape = 'u8[32768]{0}', space=vmem, size = 0x8000, scoped, tag = 'scoped mem for input reshape']
    %s3 = ssub.s32 16, 1
    %s4 = scalar_lea.vmem %s0, 28
    %v5 = vld [vmem:[%s4] sm:%s3]
    %s6 = scalar_lea.vmem [#allocation0], 56
    %7 = vst [vmem:[%s6] sm:%s3] %v5
    %s8 = scalar_lea.vmem %s0, 24
    %v9 = vld [vmem:[%s8] sm:%s3]
    %s10 = scalar_lea.vmem [#allocation0], 48
    %11 = vst [vmem:[%s10] sm:%s3] %v9
    %s12 = scalar_lea.vmem %s0, 20
    %v13 = vld [vmem:[%s12] sm:%s3]
    %s14 = scalar_lea.vmem [#allocation0], 40
    %15 = vst [vmem:[%s14] sm:%s3] %v13
    %s16 = scalar_lea.vmem %s0, 16
    %v17 = vld [vmem:[%s16] sm:%s3]
    %s18 = scalar_lea.vmem [#allocation0], 32
    %19 = vst [vmem:[%s18] sm:%s3] %v17
    %s20 = scalar_lea.vmem %s0, 12
    %v21 = vld [vmem:[%s20] sm:%s3]
    %s22 = scalar_lea.vmem [#allocation0], 24
    %23 = vst [vmem:[%s22] sm:%s3] %v21
    %s24 = scalar_lea.vmem %s0, 8
    %v25 = vld [vmem:[%s24] sm:%s3]
    %s26 = scalar_lea.vmem [#allocation0], 16
    %27 = vst [vmem:[%s26] sm:%s3] %v25
    %s28 = scalar_lea.vmem %s0, 4
    %v29 = vld [vmem:[%s28] sm:%s3]
    %s30 = scalar_lea.vmem [#allocation0], 8
    %31 = vst [vmem:[%s30] sm:%s3] %v29
    %v32 = vld [vmem:[%s0] sm:%s3]
    %33 = vst [vmem:[#allocation0] sm:%s3] %v32
    %v34 = vld [vmem:[#allocation0] ss:$8 sm:$0xf]
    %v35 = vld [vmem:[#allocation0] ss:$8 sm:$0xf0]
    %vm36 = vcmask 1047556
    %v37 = vsel %vm36, %v35, %v34
    %vm38 = vcmask 64512
    %39 = vst.msk [vmem:[%s1] sm:$0xff] %vm38, %v37
    %s40 = scalar_lea.vmem [#allocation0], 3
    %v41 = vld [vmem:[%s40] ss:$8 sm:$0xf]
    %s42 = scalar_lea.vmem [#allocation0], 3
    %v43 = vld [vmem:[%s42] ss:$8 sm:$0xf0]
    %vm44 = vcmask 1047556
    %v45 = vsel %vm44, %v43, %v41
    %46 = vrot.lane.b32.xlu0 %v45, 24
    %v47 = vpop.permute.xlu0 %46
    %vm48 = vcmask 261312
    %49 = vst.msk [vmem:[%s1] sm:$0xff] %vm48, %v47
    %s50 = scalar_lea.vmem [#allocation0], 2
    %v51 = vld [vmem:[%s50] ss:$8 sm:$0xf]
    %s52 = scalar_lea.vmem [#allocation0], 2
    %v53 = vld [vmem:[%s52] ss:$8 sm:$0xf0]
    %vm54 = vcmask 1047556
    %v55 = vsel %vm54, %v53, %v51
    %56 = vrot.lane.b32.xlu0 %v55, 16
    %v57 = vpop.permute.xlu0 %56
    %vm58 = vcmask 195712
    %59 = vst.msk [vmem:[%s1] sm:$0xff] %vm58, %v57
    %s60 = scalar_lea.vmem [#allocation0], 1
    %v61 = vld [vmem:[%s60] ss:$8 sm:$0xf]
    %s62 = scalar_lea.vmem [#allocation0], 1
    %v63 = vld [vmem:[%s62] ss:$8 sm:$0xf0]
    %vm64 = vcmask 1047556
    %v65 = vsel %vm64, %v63, %v61
    %66 = vrot.lane.b32.xlu0 %v65, 8
    %v67 = vpop.permute.xlu0 %66
    %vm68 = vcmask 130112
    %69 = vst.msk [vmem:[%s1] sm:$0xff] %vm68, %v67

// kernel: tile.29
$region0: #{tile.29}
  %s0 = inlined_call_operand.vmem [shape: f32[8,2,8], index: 0, kind: input, shape index: {}]
  %s1 = inlined_call_operand.vmem [shape: f32[8,16], index: 1, kind: output, shape index: {}]
  $region1: #{tile.29} parent=0
    #allocation0 [shape = 'u8[32768]{0}', space=vmem, size = 0x8000, scoped, tag = 'scoped mem for input reshape']
    %s3 = ssub.s32 4, 1
    %s4 = scalar_lea.vmem %s0, 14
    %v5 = vld [vmem:[%s4] sm:%s3]
    %s6 = scalar_lea.vmem [#allocation0], 56
    %7 = vst [vmem:[%s6] sm:%s3] %v5
    %s8 = scalar_lea.vmem %s0, 12
    %v9 = vld [vmem:[%s8] sm:%s3]
    %s10 = scalar_lea.vmem [#allocation0], 48
    %11 = vst [vmem:[%s10] sm:%s3] %v9
    %s12 = scalar_lea.vmem %s0, 10
    %v13 = vld [vmem:[%s12] sm:%s3]
    %s14 = scalar_lea.vmem [#allocation0], 40
    %15 = vst [vmem:[%s14] sm:%s3] %v13
    %s16 = scalar_lea.vmem %s0, 8
    %v17 = vld [vmem:[%s16] sm:%s3]
    %s18 = scalar_lea.vmem [#allocation0], 32
    %19 = vst [vmem:[%s18] sm:%s3] %v17
    %s20 = scalar_lea.vmem %s0, 6
    %v21 = vld [vmem:[%s20] sm:%s3]
    %s22 = scalar_lea.vmem [#allocation0], 24
    %23 = vst [vmem:[%s22] sm:%s3] %v21
    %s24 = scalar_lea.vmem %s0, 4
    %v25 = vld [vmem:[%s24] sm:%s3]
    %s26 = scalar_lea.vmem [#allocation0], 16
    %27 = vst [vmem:[%s26] sm:%s3] %v25
    %s28 = scalar_lea.vmem %s0, 2
    %v29 = vld [vmem:[%s28] sm:%s3]
    %s30 = scalar_lea.vmem [#allocation0], 8
    %31 = vst [vmem:[%s30] sm:%s3] %v29
    %v32 = vld [vmem:[%s0] sm:%s3]
    %33 = vst [vmem:[#allocation0] sm:%s3] %v32
    %v34 = vld [vmem:[#allocation0] ss:$8 sm:$0xf]
    %v35 = vld [vmem:[#allocation0] ss:$8 sm:$0xf0]
    %vm36 = vcmask 1047556
    %v37 = vsel %vm36, %v35, %v34
    %vm38 = vcmask 64512
    %39 = vst.msk [vmem:[%s1] sm:$0xff] %vm38, %v37
    %s40 = scalar_lea.vmem [#allocation0], 1
    %v41 = vld [vmem:[%s40] ss:$8 sm:$0xf]
    %s42 = scalar_lea.vmem [#allocation0], 1
    %v43 = vld [vmem:[%s42] ss:$8 sm:$0xf0]
    %vm44 = vcmask 1047556
    %v45 = vsel %vm44, %v43, %v41
    %46 = vrot.lane.b32.xlu0 %v45, 8
    %v47 = vpop.permute.xlu0 %46
    %vm48 = vcmask 130112
    %49 = vst.msk [vmem:[%s1] sm:$0xff] %vm48, %v47

// kernel: gpt_block.1
$region0: #{gpt_block.1}
  #allocation0 [shape = 'u32[]', space=smem, size = 0x4, offset = 0x4, fixed_abs, tag = 'smem constant byte address 0x4 - core index']
  #allocation1 [shape = 'u32[72,128]{1,0:T(1,128)}', space=vmem, size = 0x9000, scoped, tag = 'internal scratch']
  %s0 = inlined_call_operand.vmem [shape: f32[2,8,32], index: 0, kind: input, shape index: {}]
  %s1 = inlined_call_operand.vmem [shape: f32[2,8,8], index: 1, kind: input, shape index: {}]
  %s2 = inlined_call_operand.vmem [shape: f32[8,128], index: 2, kind: input, shape index: {}]
  %s3 = inlined_call_operand.vmem [shape: bf16[32,128], index: 3, kind: input, shape index: {}]
  %s4 = inlined_call_operand.vmem [shape: bf16[32,32], index: 4, kind: input, shape index: {}]
  %s5 = inlined_call_operand.vmem [shape: bf16[32,128], index: 5, kind: input, shape index: {}]
  %s6 = inlined_call_operand.vmem [shape: bf16[64,32], index: 6, kind: input, shape index: {}]
  %s7 = inlined_call_operand.vmem [shape: f32[8,128], index: 7, kind: input, shape index: {}]
  %s8 = inlined_call_operand.hbm [shape: f32[2,8,32], index: 8, kind: output, shape index: {}]
  %s9 = sld [smem:[#allocation0]]
  $region65: #{gpt_block.1} parent=0
    _
  %s11 = ssub.s32 1, %s9
  %s12 = scalar_select 0, %s11, %s9
  $region1: #{gpt_block.1} parent=0
    #allocation2 [shape = 'u8[8192]{0}', space=vmem, size = 0x2000, scoped, tag = 'output window, operand 0']
    #allocation3 [shape = 's32[2]{0}', space=sflag, size = 0x8, scoped, tag = 'scoped memory for gpt_block.1']
    %13 = vsyncpa [#allocation3], 0
    %s14 = scalar_lea.sflag [#allocation3], 1
    %15 = vsyncpa %s14, 0
    loop: start=0, step=1, limit=4
    $region2: #{gpt_block.1} parent=1 // loop_pre_header
      _
    $region3: #{gpt_block.1} parent=1 // loop_header
      %s17 = sphi 0, %s21
      %p18 = scmp.ge.s32.totalorder %s17, 4
      %s27 = sphi 0, %s29
      %s30 = sphi 0, %s27
      %s31 = sphi 0, %s30
      %s47 = sphi 0, %s31
      %s53 = sphi 0, %s55
      %s56 = sphi 0, %s53
      %s57 = sphi 0, %s56
      %s73 = sphi 0, %s57
      %s77 = sphi 0, %s77
      %s79 = sphi 0, %s77
      %s80 = sphi 0, %s79
      %s94 = sphi 0, %s80
      %s98 = sphi 0, %s98
      %s100 = sphi 0, %s98
      %s101 = sphi 0, %s100
      %s115 = sphi 0, %s101
      %s119 = sphi 0, %s119
      %s121 = sphi 0, %s119
      %s122 = sphi 0, %s121
      %s136 = sphi 0, %s122
      %s140 = sphi 0, %s140
      %s142 = sphi 0, %s140
      %s143 = sphi 0, %s142
      %s157 = sphi 0, %s143
      %s161 = sphi 0, %s161
      %s163 = sphi 0, %s161
      %s164 = sphi 0, %s163
      %s178 = sphi 0, %s164
      %s182 = sphi 0, %s182
      %s184 = sphi 0, %s182
      %s185 = sphi 0, %s184
      %s199 = sphi 0, %s185
      %s205 = sphi 0, %s207
      %s208 = sphi 0, %s205
      %s209 = sphi 0, %s208
      %s225 = sphi 0, %s209
    $region4: #{gpt_block.1} parent=1 // loop_header_branch
      %20 = sbr.rel (%p18) target = $region8
    $region5: #{gpt_block.1} parent=1 // loop_body
      %s22 = ssub.s32 %s17, 1
      %s23 = ssub.s32 %s17, 2
      %s24 = sadd.s32 %s17, 1
      %s25 = ssub.s32 %s17, %s24
      %p26 = scmp.eq.s32.totalorder %s25, 0
      %s28 = sadd.s32 %s27, 1
      %s29 = scalar_select %p26, %s27, %s28
      %p32 = pneg %p26
      %p33 = scmp.eq.s32.totalorder %s17, 1
      %p34 = por %p32, %p33
      %p35 = scmp.ne.s32.totalorder %s27, %s30
      %p36 = scmp.eq.s32.totalorder %s17, 0
      %p37 = por %p35, %p36
      %p38 = scmp.ne.s32.totalorder %s27, %s30
      %p39 = scmp.eq.s32.totalorder %s22, 1
      %p40 = por %p38, %p39
      %p41 = scmp.ne.s32.totalorder %s30, %s31
      %p42 = scmp.eq.s32.totalorder %s22, 0
      %p43 = por %p41, %p42
      %p44 = scmp.ne.s32.totalorder %s30, %s31
      %p45 = scmp.eq.s32.totalorder %s23, 1
      %p46 = por %p44, %p45
      %p48 = scmp.ne.s32.totalorder %s31, %s47
      %p49 = scmp.eq.s32.totalorder %s23, 0
      %p50 = por %p48, %p49
      %s51 = ssub.s32 %s17, %s24
      %p52 = scmp.eq.s32.totalorder %s51, 0
      %s54 = sadd.s32 %s53, 1
      %s55 = scalar_select %p52, %s53, %s54
      %p58 = pneg %p52
      %p59 = scmp.eq.s32.totalorder %s17, 1
      %p60 = por %p58, %p59
      %p61 = scmp.ne.s32.totalorder %s53, %s56
      %p62 = scmp.eq.s32.totalorder %s17, 0
      %p63 = por %p61, %p62
      %p64 = scmp.ne.s32.totalorder %s53, %s56
      %p65 = scmp.eq.s32.totalorder %s22, 1
      %p66 = por %p64, %p65
      %p67 = scmp.ne.s32.totalorder %s56, %s57
      %p68 = scmp.eq.s32.totalorder %s22, 0
      %p69 = por %p67, %p68
      %p70 = scmp.ne.s32.totalorder %s56, %s57
      %p71 = scmp.eq.s32.totalorder %s23, 1
      %p72 = por %p70, %p71
      %p74 = scmp.ne.s32.totalorder %s57, %s73
      %p75 = scmp.eq.s32.totalorder %s23, 0
      %p76 = por %p74, %p75
      %s78 = sadd.s32 %s77, 1
      %p81 = scmp.eq.s32.totalorder %s17, 1
      %p82 = scmp.ne.s32.totalorder %s77, %s79
      %p83 = scmp.eq.s32.totalorder %s17, 0
      %p84 = por %p82, %p83
      %p85 = scmp.ne.s32.totalorder %s77, %s79
      %p86 = scmp.eq.s32.totalorder %s22, 1
      %p87 = por %p85, %p86
      %p88 = scmp.ne.s32.totalorder %s79, %s80
      %p89 = scmp.eq.s32.totalorder %s22, 0
      %p90 = por %p88, %p89
      %p91 = scmp.ne.s32.totalorder %s79, %s80
      %p92 = scmp.eq.s32.totalorder %s23, 1
      %p93 = por %p91, %p92
      %p95 = scmp.ne.s32.totalorder %s80, %s94
      %p96 = scmp.eq.s32.totalorder %s23, 0
      %p97 = por %p95, %p96
      %s99 = sadd.s32 %s98, 1
      %p102 = scmp.eq.s32.totalorder %s17, 1
      %p103 = scmp.ne.s32.totalorder %s98, %s100
      %p104 = scmp.eq.s32.totalorder %s17, 0
      %p105 = por %p103, %p104
      %p106 = scmp.ne.s32.totalorder %s98, %s100
      %p107 = scmp.eq.s32.totalorder %s22, 1
      %p108 = por %p106, %p107
      %p109 = scmp.ne.s32.totalorder %s100, %s101
      %p110 = scmp.eq.s32.totalorder %s22, 0
      %p111 = por %p109, %p110
      %p112 = scmp.ne.s32.totalorder %s100, %s101
      %p113 = scmp.eq.s32.totalorder %s23, 1
      %p114 = por %p112, %p113
      %p116 = scmp.ne.s32.totalorder %s101, %s115
      %p117 = scmp.eq.s32.totalorder %s23, 0
      %p118 = por %p116, %p117
      %s120 = sadd.s32 %s119, 1
      %p123 = scmp.eq.s32.totalorder %s17, 1
      %p124 = scmp.ne.s32.totalorder %s119, %s121
      %p125 = scmp.eq.s32.totalorder %s17, 0
      %p126 = por %p124, %p125
      %p127 = scmp.ne.s32.totalorder %s119, %s121
      %p128 = scmp.eq.s32.totalorder %s22, 1
      %p129 = por %p127, %p128
      %p130 = scmp.ne.s32.totalorder %s121, %s122
      %p131 = scmp.eq.s32.totalorder %s22, 0
      %p132 = por %p130, %p131
      %p133 = scmp.ne.s32.totalorder %s121, %s122
      %p134 = scmp.eq.s32.totalorder %s23, 1
      %p135 = por %p133, %p134
      %p137 = scmp.ne.s32.totalorder %s122, %s136
      %p138 = scmp.eq.s32.totalorder %s23, 0
      %p139 = por %p137, %p138
      %s141 = sadd.s32 %s140, 1
      %p144 = scmp.eq.s32.totalorder %s17, 1
      %p145 = scmp.ne.s32.totalorder %s140, %s142
      %p146 = scmp.eq.s32.totalorder %s17, 0
      %p147 = por %p145, %p146
      %p148 = scmp.ne.s32.totalorder %s140, %s142
      %p149 = scmp.eq.s32.totalorder %s22, 1
      %p150 = por %p148, %p149
      %p151 = scmp.ne.s32.totalorder %s142, %s143
      %p152 = scmp.eq.s32.totalorder %s22, 0
      %p153 = por %p151, %p152
      %p154 = scmp.ne.s32.totalorder %s142, %s143
      %p155 = scmp.eq.s32.totalorder %s23, 1
      %p156 = por %p154, %p155
      %p158 = scmp.ne.s32.totalorder %s143, %s157
      %p159 = scmp.eq.s32.totalorder %s23, 0
      %p160 = por %p158, %p159
      %s162 = sadd.s32 %s161, 1
      %p165 = scmp.eq.s32.totalorder %s17, 1
      %p166 = scmp.ne.s32.totalorder %s161, %s163
      %p167 = scmp.eq.s32.totalorder %s17, 0
      %p168 = por %p166, %p167
      %p169 = scmp.ne.s32.totalorder %s161, %s163
      %p170 = scmp.eq.s32.totalorder %s22, 1
      %p171 = por %p169, %p170
      %p172 = scmp.ne.s32.totalorder %s163, %s164
      %p173 = scmp.eq.s32.totalorder %s22, 0
      %p174 = por %p172, %p173
      %p175 = scmp.ne.s32.totalorder %s163, %s164
      %p176 = scmp.eq.s32.totalorder %s23, 1
      %p177 = por %p175, %p176
      %p179 = scmp.ne.s32.totalorder %s164, %s178
      %p180 = scmp.eq.s32.totalorder %s23, 0
      %p181 = por %p179, %p180
      %s183 = sadd.s32 %s182, 1
      %p186 = scmp.eq.s32.totalorder %s17, 1
      %p187 = scmp.ne.s32.totalorder %s182, %s184
      %p188 = scmp.eq.s32.totalorder %s17, 0
      %p189 = por %p187, %p188
      %p190 = scmp.ne.s32.totalorder %s182, %s184
      %p191 = scmp.eq.s32.totalorder %s22, 1
      %p192 = por %p190, %p191
      %p193 = scmp.ne.s32.totalorder %s184, %s185
      %p194 = scmp.eq.s32.totalorder %s22, 0
      %p195 = por %p193, %p194
      %p196 = scmp.ne.s32.totalorder %s184, %s185
      %p197 = scmp.eq.s32.totalorder %s23, 1
      %p198 = por %p196, %p197
      %p200 = scmp.ne.s32.totalorder %s185, %s199
      %p201 = scmp.eq.s32.totalorder %s23, 0
      %p202 = por %p200, %p201
      %s203 = ssub.s32 %s17, %s24
      %p204 = scmp.eq.s32.totalorder %s203, 0
      %s206 = sadd.s32 %s205, 1
      %s207 = scalar_select %p204, %s205, %s206
      %p210 = pneg %p204
      %p211 = scmp.eq.s32.totalorder %s17, 1
      %p212 = por %p210, %p211
      %p213 = scmp.ne.s32.totalorder %s205, %s208
      %p214 = scmp.eq.s32.totalorder %s17, 0
      %p215 = por %p213, %p214
      %p216 = scmp.ne.s32.totalorder %s205, %s208
      %p217 = scmp.eq.s32.totalorder %s22, 1
      %p218 = por %p216, %p217
      %p219 = scmp.ne.s32.totalorder %s208, %s209
      %p220 = scmp.eq.s32.totalorder %s22, 0
      %p221 = por %p219, %p220
      %p222 = scmp.ne.s32.totalorder %s208, %s209
      %p223 = scmp.eq.s32.totalorder %s23, 1
      %p224 = por %p222, %p223
      %p226 = scmp.ne.s32.totalorder %s209, %s225
      %p227 = scmp.eq.s32.totalorder %s23, 0
      %p228 = por %p226, %p227
      %p229 = scmp.le.s32.totalorder 1, %s17
      %p230 = scmp.lt.s32.totalorder %s17, 3
      %p231 = pnand %p229, %p230
      %p232 = pneg %p231
      // Predicated region
      $region9: #{gpt_block.1} parent=5 // pred_check
        _
      $region10: #{gpt_block.1} parent=5 // pred_check_branch
        %234 = sbr.rel (%p231) target = $region12
      $region11: #{gpt_block.1} parent=5 // pred_region
        %s235 = ssub.s32 %s17, 1
        // Predicated region
        $region13: #{gpt_block.1} parent=11 // pred_check
          %p236 = pneg %p90
        $region14: #{gpt_block.1} parent=11 // pred_check_branch
          %238 = sbr.rel (%p236) target = $region16
        $region15: #{gpt_block.1} parent=11 // pred_region
          _
        $region16: #{gpt_block.1} parent=11 // pred_fallthru
          _
        // Predicated region
        $region17: #{gpt_block.1} parent=11 // pred_check
          %p239 = pneg %p111
        $region18: #{gpt_block.1} parent=11 // pred_check_branch
          %241 = sbr.rel (%p239) target = $region20
        $region19: #{gpt_block.1} parent=11 // pred_region
          _
        $region20: #{gpt_block.1} parent=11 // pred_fallthru
          _
        // Predicated region
        $region21: #{gpt_block.1} parent=11 // pred_check
          %p242 = pneg %p132
        $region22: #{gpt_block.1} parent=11 // pred_check_branch
          %244 = sbr.rel (%p242) target = $region24
        $region23: #{gpt_block.1} parent=11 // pred_region
          _
        $region24: #{gpt_block.1} parent=11 // pred_fallthru
          _
        // Predicated region
        $region25: #{gpt_block.1} parent=11 // pred_check
          %p245 = pneg %p153
        $region26: #{gpt_block.1} parent=11 // pred_check_branch
          %247 = sbr.rel (%p245) target = $region28
        $region27: #{gpt_block.1} parent=11 // pred_region
          _
        $region28: #{gpt_block.1} parent=11 // pred_fallthru
          _
        // Predicated region
        $region29: #{gpt_block.1} parent=11 // pred_check
          %p248 = pneg %p174
        $region30: #{gpt_block.1} parent=11 // pred_check_branch
          %250 = sbr.rel (%p248) target = $region32
        $region31: #{gpt_block.1} parent=11 // pred_region
          _
        $region32: #{gpt_block.1} parent=11 // pred_fallthru
          _
        // Predicated region
        $region33: #{gpt_block.1} parent=11 // pred_check
          %p251 = pneg %p195
        $region34: #{gpt_block.1} parent=11 // pred_check_branch
          %253 = sbr.rel (%p251) target = $region36
        $region35: #{gpt_block.1} parent=11 // pred_region
          _
        $region36: #{gpt_block.1} parent=11 // pred_fallthru
          _
      $region12: #{gpt_block.1} parent=5 // pred_fallthru
        _
      %p254 = scmp.lt.s32.totalorder %s17, 2
      // Predicated region
      $region37: #{gpt_block.1} parent=5 // pred_check
        %p255 = pneg %p254
      $region38: #{gpt_block.1} parent=5 // pred_check_branch
        %257 = sbr.rel (%p255) target = $region40
      $region39: #{gpt_block.1} parent=5 // pred_region
        // Predicated region
        $region41: #{gpt_block.1} parent=39 // pred_check
          %p258 = pneg %p37
        $region42: #{gpt_block.1} parent=39 // pred_check_branch
          %260 = sbr.rel (%p258) target = $region44
        $region43: #{gpt_block.1} parent=39 // pred_region
          %p261 = scmp.lt.s32.totalorder %s17, 1
          %s262 = scalar_select %p261, %s17, 1
          %s263 = smul.addr %s262, 8
          %s264 = scalar_lea.vmem %s0, %s263
        $region44: #{gpt_block.1} parent=39 // pred_fallthru
          _
        // Predicated region
        $region45: #{gpt_block.1} parent=39 // pred_check
          %p265 = pneg %p63
        $region46: #{gpt_block.1} parent=39 // pred_check_branch
          %267 = sbr.rel (%p265) target = $region48
        $region47: #{gpt_block.1} parent=39 // pred_region
          %p268 = scmp.lt.s32.totalorder %s17, 1
          %s269 = scalar_select %p268, %s17, 1
          %s270 = smul.addr %s269, 8
          %s271 = scalar_lea.vmem %s1, %s270
        $region48: #{gpt_block.1} parent=39 // pred_fallthru
          _
      $region40: #{gpt_block.1} parent=5 // pred_fallthru
        _
      %p272 = scmp.le.s32.totalorder 1, %s17
      %p273 = scmp.lt.s32.totalorder %s17, 3
      %p274 = pnand %p272, %p273
      %p275 = pneg %p274
      // Predicated region
      $region49: #{gpt_block.1} parent=5 // pred_check
        _
      $region50: #{gpt_block.1} parent=5 // pred_check_branch
        %277 = sbr.rel (%p274) target = $region52
      $region51: #{gpt_block.1} parent=5 // pred_region
        %s278 = ssub.s32 %s17, 1
        %p279 = scmp.lt.s32.totalorder %s22, 1
        %s280 = scalar_select %p279, %s22, 1
        %s281 = smul.addr %s280, 8
        %s282 = scalar_lea.vmem %s0, %s281
        %p283 = pneg %p43
        %p284 = pneg %p40
        %p285 = scmp.lt.s32.totalorder %s22, 1
        %s286 = scalar_select %p285, %s22, 1
        %s287 = smul.addr %s286, 8
        %s288 = scalar_lea.vmem %s1, %s287
        %p289 = pneg %p69
        %p290 = pneg %p66
        %p291 = pneg %p90
        %p292 = pneg %p87
        %p293 = pneg %p111
        %p294 = pneg %p108
        %p295 = pneg %p132
        %p296 = pneg %p129
        %p297 = pneg %p153
        %p298 = pneg %p150
        %p299 = pneg %p174
        %p300 = pneg %p171
        %p301 = pneg %p195
        %p302 = pneg %p192
        %p303 = pneg %p221
        %p304 = pneg %p218
        %s305 = sand.u32 %s208, 1
        %s306 = scalar_lea.sflag [#allocation3], %s305
        %s307 = sand.u32 %s208, 1
        %s308 = smul.addr %s307, 8
        %s309 = scalar_lea.vmem [#allocation2], %s308
        %p310 = scmp.lt.s32.totalorder %s22, 1
        %s311 = scalar_select %p310, %s22, 1
        %s312 = smul.addr %s311, 8
        %s313 = scalar_lea.vmem %s0, %s312
        %p314 = scmp.lt.s32.totalorder %s22, 1
        %s315 = scalar_select %p314, %s22, 1
        %s316 = smul.addr %s315, 8
        %s317 = scalar_lea.vmem %s1, %s316
        %v319 = vld [vmem:[%s313] sm:$0xff]
        %v320 = vld [vmem:[%s317] sm:$0xff]
        %v321 = vld [vmem:[%s7] sm:$0x1]
        %v322 = vld [vmem:[%s7 + $0x1] sm:$0x1]
        %v323 = vld [vmem:[%s7 + $0x2] sm:$0x1]
        %v324 = vld [vmem:[%s7 + $0x3] sm:$0x1]
        %v325 = vld [vmem:[%s7 + $0x4] sm:$0x1]
        %v326 = vld [vmem:[%s7 + $0x5] sm:$0x1]
        %v327 = vmul.f32 %v319, %v319
        %vm328 = vcmask 261120
        %v329 = vsel %vm328, %v327, 0.0
        %330 = vadd.xlane.f32.xlu0 %v329
        %v331 = vpop.xlane.xlu0 %330
        %v332 = vrcp.pop 32.0
        %v333 = vmul.f32 32.0, %v332
        %v334 = vsub.f32 1.0, %v333
        %v335 = vmul.f32 %v332, %v334
        %v336 = vadd.f32 %v332, %v335
        %vm337 = vweird.f32 %v332
        %v338 = vsel %vm337, %v332, %v336
        %v339 = vmul.f32 %v331, %v338
        %v340 = vadd.f32 %v339, 1e-08
        %v341 = vrsqrt.pop %v340
        %v342 = vmul.f32 %v341, %v340
        %v343 = vmul.f32 %v342, %v341
        %v344 = vmul.f32 0.5, %v343
        %v345 = vsub.f32 1.5, %v344
        %v346 = vmul.f32 %v341, %v345
        %vm347 = vweird.f32 %v340
        %vm348 = vweird.f32 %v341
        %vm349 = vmor %vm347, %vm348
        %v350 = vsel %vm349, %v341, %v346
        %v351 = vmul.f32 %v319, %v350
        %v352 = vperm.slane %v321, 0
        %v353 = vmul.f32 %v351, %v352
        %v354 = vpack.c.bf16 %v353, %v353
        %v355 = vld [vmem:[%s3] sm:$0xf]
        %v356 = vld [vmem:[%s3 + $0x4] sm:$0xf]
        %v357 = vld [vmem:[%s3 + $0x8] sm:$0xf]
        %v358 = vld [vmem:[%s3 + $0xc] sm:$0xf]
        %v359 = vperm.slane %v322, 0
        %v364 = vunpack.c.l.b16 %v355
        %v365 = vunpack.c.l.b16 %v356
        %v366 = vunpack.c.l.b16 %v357
        %v367 = vunpack.c.l.b16 %v358
        %v368 = vpack.c.b16 %v365, %v364
        %v369 = vpack.c.b16 %v367, %v366
        %v373 = vsel %vm328, %v354, 0
        %375 = vmatpush.bf16.msra.mxu0 0
        %376 = vmatpush.bf16.msra.mxu0 0
        %377 = vmatpush.bf16.msra.mxu0 0
        %378 = vmatpush.bf16.msra.mxu0 0
        %379 = vmatpush.bf16.msra.mxu0 0
        %380 = vmatpush.bf16.msra.mxu0 0
        %381 = vmatpush.bf16.msra.mxu0 %v369
        %382 = vmatpush.bf16.msra.mxu0 %v368
        %383 = vmatmul.bf16.gmra.mxu0 %v373
        %v384 = vpop.f32.mrf.mxu0
        %v385 = vadd.f32 %v359, %v384
        %v386 = vpop.f32.mrf.mxu0
        %387 = vdwg.mxu0
        %v388 = vld [vmem:[%s2] sm:$0xff]
        %v389 = vmul.f32 %v385, %v388
        %391 = vrot.lane.b32.xlu0 %v389, 64
        %v392 = vpop.permute.xlu0 %391
        %v394 = vadd.f32 %v389, %v392
        %396 = vrot.lane.b32.xlu0 %v394, 120
        %v397 = vpop.permute.xlu0 %396
        %399 = vrot.lane.b32.xlu0 %v394, 112
        %v400 = vpop.permute.xlu0 %399
        %402 = vrot.lane.b32.xlu0 %v394, 104
        %v403 = vpop.permute.xlu0 %402
        %v405 = vpack.c.bf16 %v394, %v394
        %v406 = vpack.c.bf16 %v397, %v397
        %v407 = vpack.c.bf16 %v400, %v400
        %v408 = vpack.c.bf16 %v403, %v403
        %v410 = vunpack.c.l.b16 %v405
        %v411 = vpack.c.b16 %v410, %v410
        %412 = vrot.lane.b32.xlu0 %v411, 96
        %v413 = vpop.permute.xlu0 %412
        %vm414 = vcmask 64512
        %v416 = vsel %vm414, %v405, 0
        %v419 = vsel %vm414, %v413, 0
        %421 = vmatpush.bf16.xpose.msra.mxu0 0
        %422 = vmatpush.bf16.xpose.msra.mxu0 0
        %423 = vmatpush.bf16.xpose.msra.mxu0 0
        %424 = vmatpush.bf16.xpose.msra.mxu0 0
        %425 = vmatpush.bf16.xpose.msra.mxu0 0
        %426 = vmatpush.bf16.xpose.msra.mxu0 0
        %427 = vmatpush.bf16.xpose.msra.mxu0 0
        %428 = vmatpush.bf16.xpose.msra.mxu0 %v419
        %429 = vmatmul.bf16.gmra.mxu0 %v416
        %v430 = vpop.f32.mrf.mxu0
        %v431 = vadd.f32 %v320, %v430
        %v432 = vpop.f32.mrf.mxu0
        %433 = vdwg.mxu0
        %v435 = vsel %vm414, %v406, 0
        %437 = vmatpush.bf16.xpose.msra.mxu0 0
        %438 = vmatpush.bf16.xpose.msra.mxu0 0
        %439 = vmatpush.bf16.xpose.msra.mxu0 0
        %440 = vmatpush.bf16.xpose.msra.mxu0 0
        %441 = vmatpush.bf16.xpose.msra.mxu0 0
        %442 = vmatpush.bf16.xpose.msra.mxu0 0
        %443 = vmatpush.bf16.xpose.msra.mxu0 0
        %444 = vmatpush.bf16.xpose.msra.mxu0 %v419
        %445 = vmatmul.bf16.gmra.mxu0 %v435
        %v446 = vpop.f32.mrf.mxu0
        %v447 = vadd.f32 %v320, %v446
        %v448 = vpop.f32.mrf.mxu0
        %449 = vdwg.mxu0
        %v451 = vunpack.c.l.b16 %v406
        %v452 = vpack.c.b16 %v451, %v451
        %453 = vrot.lane.b32.xlu0 %v452, 96
        %v454 = vpop.permute.xlu0 %453
        %v456 = vsel %vm414, %v407, 0
        %v459 = vsel %vm414, %v454, 0
        %461 = vmatpush.bf16.xpose.msra.mxu0 0
        %462 = vmatpush.bf16.xpose.msra.mxu0 0
        %463 = vmatpush.bf16.xpose.msra.mxu0 0
        %464 = vmatpush.bf16.xpose.msra.mxu0 0
        %465 = vmatpush.bf16.xpose.msra.mxu0 0
        %466 = vmatpush.bf16.xpose.msra.mxu0 0
        %467 = vmatpush.bf16.xpose.msra.mxu0 0
        %468 = vmatpush.bf16.xpose.msra.mxu0 %v459
        %469 = vmatmul.bf16.gmra.mxu0 %v456
        %v470 = vpop.f32.mrf.mxu0
        %v471 = vadd.f32 %v320, %v470
        %v472 = vpop.f32.mrf.mxu0
        %473 = vdwg.mxu0
        %v475 = vsel %vm414, %v408, 0
        %477 = vmatpush.bf16.xpose.msra.mxu0 0
        %478 = vmatpush.bf16.xpose.msra.mxu0 0
        %479 = vmatpush.bf16.xpose.msra.mxu0 0
        %480 = vmatpush.bf16.xpose.msra.mxu0 0
        %481 = vmatpush.bf16.xpose.msra.mxu0 0
        %482 = vmatpush.bf16.xpose.msra.mxu0 0
        %483 = vmatpush.bf16.xpose.msra.mxu0 0
        %484 = vmatpush.bf16.xpose.msra.mxu0 %v459
        %485 = vmatmul.bf16.gmra.mxu0 %v475
        %v486 = vpop.f32.mrf.mxu0
        %v487 = vadd.f32 %v320, %v486
        %v488 = vpop.f32.mrf.mxu0
        %489 = vdwg.mxu0
        %v490 = vsel %vm414, %v431, -inf
        %491 = vmax.xlane.f32.xlu0 %v490
        %v492 = vpop.xlane.xlu0 %491
        %v493 = vsel %vm414, %v447, -inf
        %494 = vmax.xlane.f32.xlu0 %v493
        %v495 = vpop.xlane.xlu0 %494
        %v496 = vsel %vm414, %v471, -inf
        %497 = vmax.xlane.f32.xlu0 %v496
        %v498 = vpop.xlane.xlu0 %497
        %v499 = vsel %vm414, %v487, -inf
        %500 = vmax.xlane.f32.xlu0 %v499
        %v501 = vpop.xlane.xlu0 %500
        %v502 = vsub.f32 %v431, %v492
        %v503 = vsub.f32 %v447, %v495
        %v504 = vsub.f32 %v471, %v498
        %v505 = vsub.f32 %v487, %v501
        %v506 = vmul.f32 %v502, 1.442695
        %v507 = vpow.pop %v506
        %v508 = vmul.f32 %v503, 1.442695
        %v509 = vpow.pop %v508
        %v510 = vmul.f32 %v504, 1.442695
        %v511 = vpow.pop %v510
        %v512 = vmul.f32 %v505, 1.442695
        %v513 = vpow.pop %v512
        %v514 = vsel %vm414, %v507, 0.0
        %515 = vadd.xlane.f32.xlu0 %v514
        %v516 = vpop.xlane.xlu0 %515
        %v517 = vsel %vm414, %v509, 0.0
        %518 = vadd.xlane.f32.xlu0 %v517
        %v519 = vpop.xlane.xlu0 %518
        %v520 = vsel %vm414, %v511, 0.0
        %521 = vadd.xlane.f32.xlu0 %v520
        %v522 = vpop.xlane.xlu0 %521
        %v523 = vsel %vm414, %v513, 0.0
        %524 = vadd.xlane.f32.xlu0 %v523
        %v525 = vpop.xlane.xlu0 %524
        %v526 = vrcp.pop %v516
        %v527 = vrcp.pop %v519
        %v528 = vrcp.pop %v522
        %v529 = vrcp.pop %v525
        %v530 = vmul.f32 %v507, %v526
        %v531 = vmul.f32 %v509, %v527
        %v532 = vmul.f32 %v511, %v528
        %v533 = vmul.f32 %v513, %v529
        %v534 = vpack.c.bf16 %v530, %v530
        %v535 = vpack.c.bf16 %v531, %v531
        %v536 = vpack.c.bf16 %v532, %v532
        %v537 = vpack.c.bf16 %v533, %v533
        %538 = vrot.lane.b32.xlu0 %v411, 80
        %v539 = vpop.permute.xlu0 %538
        %v541 = vsel %vm414, %v534, 0
        %vm543 = vcmask 1043456
        %v545 = vsel %vm543, %v539, 0
        %547 = vmatpush.bf16.msra.mxu0 0
        %548 = vmatpush.bf16.msra.mxu0 0
        %549 = vmatpush.bf16.msra.mxu0 0
        %550 = vmatpush.bf16.msra.mxu0 0
        %551 = vmatpush.bf16.msra.mxu0 0
        %552 = vmatpush.bf16.msra.mxu0 0
        %553 = vmatpush.bf16.msra.mxu0 0
        %554 = vmatpush.bf16.msra.mxu0 %v545
        %555 = vmatmul.bf16.gmra.mxu0 %v541
        %v556 = vpop.f32.mrf.mxu0
        %v557 = vadd.f32 0.0, %v556
        %v558 = vpop.f32.mrf.mxu0
        %559 = vdwg.mxu0
        %v561 = vsel %vm414, %v535, 0
        %563 = vmatpush.bf16.msra.mxu0 0
        %564 = vmatpush.bf16.msra.mxu0 0
        %565 = vmatpush.bf16.msra.mxu0 0
        %566 = vmatpush.bf16.msra.mxu0 0
        %567 = vmatpush.bf16.msra.mxu0 0
        %568 = vmatpush.bf16.msra.mxu0 0
        %569 = vmatpush.bf16.msra.mxu0 0
        %570 = vmatpush.bf16.msra.mxu0 %v545
        %571 = vmatmul.bf16.gmra.mxu0 %v561
        %v572 = vpop.f32.mrf.mxu0
        %v573 = vadd.f32 0.0, %v572
        %v574 = vpop.f32.mrf.mxu0
        %575 = vdwg.mxu0
        %576 = vrot.lane.b32.xlu0 %v452, 80
        %v577 = vpop.permute.xlu0 %576
        %v579 = vsel %vm414, %v536, 0
        %v582 = vsel %vm543, %v577, 0
        %584 = vmatpush.bf16.msra.mxu0 0
        %585 = vmatpush.bf16.msra.mxu0 0
        %586 = vmatpush.bf16.msra.mxu0 0
        %587 = vmatpush.bf16.msra.mxu0 0
        %588 = vmatpush.bf16.msra.mxu0 0
        %589 = vmatpush.bf16.msra.mxu0 0
        %590 = vmatpush.bf16.msra.mxu0 0
        %591 = vmatpush.bf16.msra.mxu0 %v582
        %592 = vmatmul.bf16.gmra.mxu0 %v579
        %v593 = vpop.f32.mrf.mxu0
        %v594 = vadd.f32 0.0, %v593
        %v595 = vpop.f32.mrf.mxu0
        %596 = vdwg.mxu0
        %v598 = vsel %vm414, %v537, 0
        %600 = vmatpush.bf16.msra.mxu0 0
        %601 = vmatpush.bf16.msra.mxu0 0
        %602 = vmatpush.bf16.msra.mxu0 0
        %603 = vmatpush.bf16.msra.mxu0 0
        %604 = vmatpush.bf16.msra.mxu0 0
        %605 = vmatpush.bf16.msra.mxu0 0
        %606 = vmatpush.bf16.msra.mxu0 0
        %607 = vmatpush.bf16.msra.mxu0 %v582
        %608 = vmatmul.bf16.gmra.mxu0 %v598
        %v609 = vpop.f32.mrf.mxu0
        %v610 = vadd.f32 0.0, %v609
        %v611 = vpop.f32.mrf.mxu0
        %612 = vdwg.mxu0
        %614 = vrot.lane.b32.xlu0 %v573, 8
        %v615 = vpop.permute.xlu0 %614
        %618 = vrot.lane.b32.xlu0 %v594, 16
        %v619 = vpop.permute.xlu0 %618
        %622 = vrot.lane.b32.xlu0 %v610, 24
        %v623 = vpop.permute.xlu0 %622
        %v625 = vsel %vm414, %v557, %v615
        %vm626 = vcmask 130048
        %v627 = vsel %vm626, %v625, %v619
        %vm628 = vcmask 195584
        %v629 = vsel %vm628, %v627, %v623
        %v630 = vpack.c.bf16 %v629, %v629
        %v631 = vld [vmem:[%s4] sm:$0xf]
        %v632 = vld [vmem:[%s4 + $0x4] sm:$0xf]
        %v633 = vld [vmem:[%s4 + $0x8] sm:$0xf]
        %v634 = vld [vmem:[%s4 + $0xc] sm:$0xf]
        %v635 = vperm.slane %v323, 0
        %v640 = vunpack.c.l.b16 %v631
        %v641 = vunpack.c.l.b16 %v632
        %v642 = vunpack.c.l.b16 %v633
        %v643 = vunpack.c.l.b16 %v634
        %v644 = vpack.c.b16 %v641, %v640
        %v645 = vpack.c.b16 %v643, %v642
        %v649 = vsel %vm328, %v630, 0
        %651 = vmatpush.bf16.msra.mxu0 0
        %652 = vmatpush.bf16.msra.mxu0 0
        %653 = vmatpush.bf16.msra.mxu0 0
        %654 = vmatpush.bf16.msra.mxu0 0
        %655 = vmatpush.bf16.msra.mxu0 0
        %656 = vmatpush.bf16.msra.mxu0 0
        %657 = vmatpush.bf16.msra.mxu0 %v645
        %658 = vmatpush.bf16.msra.mxu0 %v644
        %659 = vmatmul.bf16.gmra.mxu0 %v649
        %v660 = vpop.f32.mrf.mxu0
        %v661 = vadd.f32 %v635, %v660
        %v662 = vpop.f32.mrf.mxu0
        %663 = vdwg.mxu0
        %v664 = vadd.f32 %v319, %v661
        %v665 = vmul.f32 %v664, %v664
        %v666 = vsel %vm328, %v665, 0.0
        %667 = vadd.xlane.f32.xlu0 %v666
        %v668 = vpop.xlane.xlu0 %667
        %v669 = vmul.f32 %v668, %v338
        %v670 = vadd.f32 %v669, 1e-08
        %v671 = vrsqrt.pop %v670
        %v672 = vmul.f32 %v671, %v670
        %v673 = vmul.f32 %v672, %v671
        %v674 = vmul.f32 0.5, %v673
        %v675 = vsub.f32 1.5, %v674
        %v676 = vmul.f32 %v671, %v675
        %vm677 = vweird.f32 %v670
        %vm678 = vweird.f32 %v671
        %vm679 = vmor %vm677, %vm678
        %v680 = vsel %vm679, %v671, %v676
        %v681 = vmul.f32 %v664, %v680
        %v682 = vperm.slane %v324, 0
        %v683 = vmul.f32 %v681, %v682
        %v684 = vpack.c.bf16 %v683, %v683
        %v685 = vld [vmem:[%s5] sm:$0xf]
        %v686 = vld [vmem:[%s5 + $0x4] sm:$0xf]
        %v687 = vld [vmem:[%s5 + $0x8] sm:$0xf]
        %v688 = vld [vmem:[%s5 + $0xc] sm:$0xf]
        %v689 = vperm.slane %v325, 0
        %v694 = vunpack.c.l.b16 %v685
        %v695 = vunpack.c.l.b16 %v686
        %v696 = vunpack.c.l.b16 %v687
        %v697 = vunpack.c.l.b16 %v688
        %v698 = vpack.c.b16 %v695, %v694
        %v699 = vpack.c.b16 %v697, %v696
        %v703 = vsel %vm328, %v684, 0
        %705 = vmatpush.bf16.msra.mxu0 0
        %706 = vmatpush.bf16.msra.mxu0 0
        %707 = vmatpush.bf16.msra.mxu0 0
        %708 = vmatpush.bf16.msra.mxu0 0
        %709 = vmatpush.bf16.msra.mxu0 0
        %710 = vmatpush.bf16.msra.mxu0 0
        %711 = vmatpush.bf16.msra.mxu0 %v699
        %712 = vmatpush.bf16.msra.mxu0 %v698
        %713 = vmatmul.bf16.gmra.mxu0 %v703
        %v714 = vpop.f32.mrf.mxu0
        %v715 = vadd.f32 %v689, %v714
        %v716 = vpop.f32.mrf.mxu0
        %717 = vdwg.mxu0
        %v718 = vxor.u32 %v715, 2147483648
        %v719 = vmul.f32 %v718, 1.442695
        %v720 = vpow.pop %v719
        %v721 = vadd.f32 %v720, 1.0
        %v722 = vrcp.pop %v721
        %v723 = vmul.f32 %v721, %v722
        %v724 = vsub.f32 1.0, %v723
        %v725 = vmul.f32 %v722, %v724
        %v726 = vadd.f32 %v722, %v725
        %vm727 = vweird.f32 %v721
        %vm728 = vweird.f32 %v722
        %vm729 = vmor %vm727, %vm728
        %v730 = vsel %vm729, %v722, %v726
        %v731 = vand.u32 2147483647, %v721
        %vm732 = vcmp.eq.f32.partialorder %v731, 8.507059e+37
        %v733 = vand.u32 %v721, 2147483648
        %v734 = vor.u32 1.1754944e-38, %v733
        %v735 = vsel %vm732, %v734, %v730
        %v736 = vmul.f32 1.0, %v735
        %v737 = vmul.f32 %v715, %v736
        %739 = vrot.lane.b32.xlu0 %v715, 64
        %v740 = vpop.permute.xlu0 %739
        %v742 = vmul.f32 %v737, %v740
        %v743 = vpack.c.bf16 %v742, %v742
        %v744 = vld [vmem:[%s6] sm:$0xf]
        %v745 = vld [vmem:[%s6 + $0x4] sm:$0xf]
        %v746 = vld [vmem:[%s6 + $0x8] sm:$0xf]
        %v747 = vld [vmem:[%s6 + $0xc] sm:$0xf]
        %v748 = vld [vmem:[%s6 + $0x10] sm:$0xf]
        %v749 = vld [vmem:[%s6 + $0x14] sm:$0xf]
        %v750 = vld [vmem:[%s6 + $0x18] sm:$0xf]
        %v751 = vld [vmem:[%s6 + $0x1c] sm:$0xf]
        %v752 = vperm.slane %v326, 0
        %v761 = vunpack.c.l.b16 %v744
        %v762 = vunpack.c.l.b16 %v745
        %v763 = vunpack.c.l.b16 %v746
        %v764 = vunpack.c.l.b16 %v747
        %v765 = vunpack.c.l.b16 %v748
        %v766 = vunpack.c.l.b16 %v749
        %v767 = vunpack.c.l.b16 %v750
        %v768 = vunpack.c.l.b16 %v751
        %v769 = vpack.c.b16 %v762, %v761
        %v770 = vpack.c.b16 %v764, %v763
        %v771 = vpack.c.b16 %v766, %v765
        %v772 = vpack.c.b16 %v768, %v767
        %vm777 = vcmask 523264
        %v779 = vsel %vm777, %v743, 0
        %781 = vmatpush.bf16.msra.mxu0 0
        %782 = vmatpush.bf16.msra.mxu0 0
        %783 = vmatpush.bf16.msra.mxu0 0
        %784 = vmatpush.bf16.msra.mxu0 0
        %785 = vmatpush.bf16.msra.mxu0 %v772
        %786 = vmatpush.bf16.msra.mxu0 %v771
        %787 = vmatpush.bf16.msra.mxu0 %v770
        %788 = vmatpush.bf16.msra.mxu0 %v769
        %789 = vmatmul.bf16.gmra.mxu0 %v779
        %v790 = vpop.f32.mrf.mxu0
        %v791 = vadd.f32 %v752, %v790
        %v792 = vpop.f32.mrf.mxu0
        %793 = vdwg.mxu0
        %v794 = vadd.f32 %v664, %v791
        %795 = vst.msk [vmem:[%s309] sm:$0xff] %vm328, %v794
        %s796 = sand.u32 %s208, 1
        %s797 = scalar_lea.sflag [#allocation3], %s796
        %s798 = sand.u32 %s208, 1
        %s799 = smul.addr %s798, 8
        %s800 = scalar_lea.vmem [#allocation2], %s799
        // Predicated region
        $region53: #{gpt_block.1} parent=51 // pred_check
          %p801 = pneg %p218
        $region54: #{gpt_block.1} parent=51 // pred_check_branch
          %803 = sbr.rel (%p801) target = $region56
        $region55: #{gpt_block.1} parent=51 // pred_region
          %805 = vsyncadd %s797, 0
          %s806 = smul.addr %s22, 8
          %s807 = scalar_lea.hbm %s8, %s806
          %s809 = sshll.u32 %s800, 4
          %s810 = int_to_ptr.vmem [resolvable:$true] %s809
          %s811 = sshll.u32 %s807, 4
          %s812 = int_to_ptr.hbm [resolvable:$true] %s811
          %814 = dma.vmem_to_hbm [thread:$0]  %s810, 128, %s812, %s797
        $region56: #{gpt_block.1} parent=51 // pred_fallthru
          _
      $region52: #{gpt_block.1} parent=5 // pred_fallthru
        _
      %p815 = scmp.le.s32.totalorder 2, %s17
      // Predicated region
      $region57: #{gpt_block.1} parent=5 // pred_check
        %p816 = pneg %p815
      $region58: #{gpt_block.1} parent=5 // pred_check_branch
        %818 = sbr.rel (%p816) target = $region60
      $region59: #{gpt_block.1} parent=5 // pred_region
        %s819 = ssub.s32 %s17, 2
        // Predicated region
        $region61: #{gpt_block.1} parent=59 // pred_check
          %p820 = pneg %p224
        $region62: #{gpt_block.1} parent=59 // pred_check_branch
          %822 = sbr.rel (%p820) target = $region64
        $region63: #{gpt_block.1} parent=59 // pred_region
          %s823 = sand.u32 %s209, 1
          %s824 = scalar_lea.sflag [#allocation3], %s823
          %s825 = sand.u32 %s209, 1
          %s826 = smul.addr %s825, 8
          %s827 = scalar_lea.vmem [#allocation2], %s826
          %829 = dma.done %s824, 128
        $region64: #{gpt_block.1} parent=59 // pred_fallthru
          _
      $region60: #{gpt_block.1} parent=5 // pred_fallthru
        _
    $region6: #{gpt_block.1} parent=1 // loop_footer
      %s21 = sadd.s32 1, %s17
    $region7: #{gpt_block.1} parent=1 // loop_footer_branch
      %16 = sbr.rel target = $region3
    $region8: #{gpt_block.1} parent=1 // loop_exit
      _
    %830 = vsyncpa [#allocation3], 1
    %s831 = scalar_lea.sflag [#allocation3], 1
    %832 = vsyncpa %s831, 1

</llo_original>
